<compile_context>
chip_gen: v7x
topology: tpu7x:2x2x1
jax: 0.10.0
libtpu: 0.0.40
codegen_flags: <defaults>
</compile_context>

<pallas_src>
import functools

import jax
import jax.numpy as jnp
from jax.experimental import pallas as pl
from jax.experimental.pallas import tpu as pltpu

TAU = 2.0
VTH = 1.0
BN_EPS = 1e-5


@functools.lru_cache(maxsize=None)
def _roll_is_numpy_convention() -> bool:
    """Probe pltpu.roll's sign convention once.  The probe is a tiny compiled
    pallas_call on the same default TPU backend as the main kernel, so the
    detected convention always matches what the main kernel will see."""
    def k(x_ref, o_ref):
        o_ref[...] = pltpu.roll(x_ref[...], 1, axis=1)

    x = jax.lax.broadcasted_iota(jnp.float32, (8, 128), 1)
    y = pl.pallas_call(k, out_shape=jax.ShapeDtypeStruct((8, 128), jnp.float32))(x)
    # np.roll convention: row 0 becomes [127, 0, 1, ...]
    return bool(y[0, 0] == 127.0)


@functools.lru_cache(maxsize=None)
def _compute_dtype():
    """bf16 mask/roll path on v6e/v7x (bf16 VPU); f32 on v5e (no bf16 VALU)."""
    try:
        kind = jax.devices()[0].device_kind.lower()
    except Exception:
        return jnp.bfloat16
    if "v5 lite" in kind or "v5e" in kind or "v5lite" in kind:
        return jnp.float32
    return jnp.bfloat16


def _make_kernel(W, HW, C, Cpad, B_tile, roll_np, cd, single_matmul):
    offs = tuple(oy * W + ox for oy in (-1, 0, 1) for ox in (-1, 0, 1))

    def shifted(img, off):
        # returns s with s[:, p] = img[:, (p + off) % HW]; wrapped positions are
        # zeroed by the boundary masks, so circular semantics are fine.
        if off == 0:
            return img
        amt = (-off) % HW if roll_np else off % HW
        return pltpu.roll(img, amt, axis=1)

    def kernel(x_ref, thr0_ref, thr1_ref, mask_ref, w1_ref, w2_ref,
               out_ref, mid_ref):
        # Hoist the 9 mask loads (and the sublane broadcast when it is cheap)
        # once per grid step; reused by both convs and every image in the tile.
        if Cpad <= 32:
            mvals = [jnp.broadcast_to(mask_ref[k], (Cpad, HW)) for k in range(9)]
        else:
            mvals = [mask_ref[k] for k in range(9)]

        def conv(img_cd, w_ref):
            # img_cd: (Cpad, HW) in compute dtype `cd`; returns (Cpad, HW) f32.
            blocks = [(shifted(img_cd, offs[k]) * mvals[k]).astype(jnp.bfloat16)
                      for k in range(9)]
            if single_matmul:
                cols = jnp.concatenate(blocks, axis=0)            # (9*Cpad, HW)
                return jnp.dot(w_ref[...], cols,
                               preferred_element_type=jnp.float32)
            acc = jnp.dot(w_ref[0], blocks[0], preferred_element_type=jnp.float32)
            for k in range(1, 9):
                acc += jnp.dot(w_ref[k], blocks[k],
                               preferred_element_type=jnp.float32)
            return acc

        for b in range(B_tile):
            x = x_ref[b]                                          # (Cpad, HW) f32

            # ---- conv1 (BN1 scale folded into w1); BN1 bias + LIF1 in thr0 ----
            y1 = conv(x.astype(cd), w1_ref)
            spike1 = (y1 >= thr0_ref[b]).astype(cd)               # padded rows -> 0
            mid_ref[b] = spike1.astype(jnp.bfloat16)[:C]

            # ---- conv2 (BN2 scale folded) + residual; BN2 bias + LIF2 in thr1 ----
            y2 = conv(spike1, w2_ref)
            out_ref[b] = ((y2 + x) >= thr1_ref[b]).astype(jnp.bfloat16)[:C]

    return kernel


def spiking_residual_block(x_nchw, v_init_nchw, w1_oihw, w2_oihw, bn1, bn2,
                           *, out_dtype=jnp.float32):
    """x: (N,C,H,W); v_init: (2,N,C,H,W); w: (Cout,Cin,3,3) OIHW; bn: (gamma,beta,mean,var).
    Returns (out, mid_res) in NCHW.  Spikes are exactly {0,1}; pass
    out_dtype=jnp.bfloat16 to skip the (lossless) post-kernel cast."""
    N, C, H, W = x_nchw.shape
    Cout, Cin, kh, kw = w1_oihw.shape
    # the residual add (and this single-tile layout) require Cin == Cout, stride 1, 3x3
    assert Cin == C and Cout == C and kh == 3 and kw == 3
    assert w2_oihw.shape == (C, C, 3, 3)

    HW = H * W
    Cpad = max(8, -(-C // 8) * 8)          # channel axis padded to a sublane multiple
    single = Cpad <= 16                    # one big matmul vs 9-term accumulate
    cd = _compute_dtype()
    cd_size = jnp.dtype(cd).itemsize

    def pad_c(a):                          # (N, C, HW) -> (N, Cpad, HW)
        if Cpad == C:
            return a
        return jnp.pad(a, ((0, 0), (0, Cpad - C), (0, 0)))

    x = pad_c(x_nchw.reshape(N, C, HW).astype(jnp.float32))

    def fold(w_oihw, bn):
        # fold the BN scale into the conv weight; return the remaining bias (per channel)
        g, b, m, var = bn
        s = (g / jnp.sqrt(var + BN_EPS)).astype(jnp.float32)          # (C,)
        bias = (b - m * s).astype(jnp.float32)                        # (C,)
        w = w_oihw.astype(jnp.float32) * s[:, None, None, None]
        w = jnp.transpose(w, (2, 3, 0, 1)).reshape(9, C, C)           # (k, Cout, Cin)
        w = jnp.pad(w, ((0, 0), (0, Cpad - C), (0, Cpad - C)))
        if single:
            # (Cout, 9*Cin) with K index = k*Cpad + cin, matching the concat order
            w = jnp.transpose(w, (1, 0, 2)).reshape(Cpad, 9 * Cpad)
        return w.astype(jnp.bfloat16), bias

    w1f, b1 = fold(w1_oihw, bn1)
    w2f, b2 = fold(w2_oihw, bn2)

    def make_thr(v, bias):
        # LIF (v_reset=None, decay_input=True, 1 step):
        #   v = v0 + (y + bias - v0)/tau ; spike = (v >= vth)
        # <=> y >= thr,  thr = tau*vth - (tau-1)*v0 - bias
        # (fused into this reshape/pad transform of v_init -> no extra HBM pass)
        v = v.reshape(N, C, HW).astype(jnp.float32)
        thr = (TAU * VTH) - (TAU - 1.0) * v - bias[None, :, None]
        if Cpad != C:
            thr = jnp.pad(thr, ((0, 0), (0, Cpad - C), (0, 0)),
                          constant_values=TAU * VTH)   # padded channels never spike
        return thr

    thr0 = make_thr(v_init_nchw[0], b1)
    thr1 = make_thr(v_init_nchw[1], b2)

    # boundary-validity masks for the 9 kernel offsets, on the flattened spatial axis
    yy, xx = jnp.meshgrid(jnp.arange(H), jnp.arange(W), indexing="ij")
    yy = yy.reshape(1, HW)
    xx = xx.reshape(1, HW)
    masks = jnp.stack(
        [((yy + oy >= 0) & (yy + oy < H) & (xx + ox >= 0) & (xx + ox < W))
         for oy in (-1, 0, 1) for ox in (-1, 0, 1)],
        axis=0).astype(cd)                                            # (9, 1, HW)

    # ---- per-grid-step VMEM estimate (drives B_tile and vmem_limit_bytes) ----
    w_bytes = 2 * (9 * Cpad * Cpad) * 2            # w1 + w2 (bf16)
    mask_bytes = 9 * HW * cd_size

    def step_bytes(bt):
        ins = bt * Cpad * HW * 4 * 3               # x, thr0, thr1 (f32)
        outs = bt * C * HW * 2 * 2                 # out, mid (bf16)
        # live conv intermediates: im2col (single path) or a few blocks, + f32 temps
        scratch = (9 if single else 3) * Cpad * HW * 2 + 4 * Cpad * HW * 4
        return 2 * (ins + outs) + 2 * (w_bytes + mask_bytes) + bt * scratch

    # batch-tile images per grid step to amortize the ~0.35us step overhead on
    # small images, but keep >= 2 grid steps when N >= 2 (v7x has 2 TensorCores).
    budget = 12 * 1024 * 1024
    bt_cap = max(1, N // 2) if N >= 2 else 1
    B_tile = 1
    for bt in range(1, min(N, 8) + 1):
        if N % bt == 0 and bt <= bt_cap and step_bytes(bt) <= budget:
            B_tile = bt

    kernel = _make_kernel(W, HW, C, Cpad, B_tile, _roll_is_numpy_convention(),
                          cd, single)

    img_in = pl.BlockSpec((B_tile, Cpad, HW), lambda n: (n, 0, 0))
    img_out = pl.BlockSpec((B_tile, C, HW), lambda n: (n, 0, 0))
    const = lambda shp: pl.BlockSpec(shp, lambda n: (0,) * len(shp))

    cparams = dict(dimension_semantics=("parallel",))
    est = step_bytes(B_tile)
    if est > 12 * 1024 * 1024:
        # TODO(synk): for production C*H*W add an H-row grid axis with a 2-row
        # input halo (+1 recomputed spike1 halo row) so per-step blocks stay well
        # under v7x's 64 MiB VMEM; whole-image tiles are fine at these sizes.
        cparams["vmem_limit_bytes"] = int(min(2 * est, 96 * 1024 * 1024))

    out, mid = pl.pallas_call(
        kernel,
        out_shape=(jax.ShapeDtypeStruct((N, C, HW), jnp.bfloat16),
                   jax.ShapeDtypeStruct((N, C, HW), jnp.bfloat16)),
        grid_spec=pltpu.PrefetchScalarGridSpec(
            num_scalar_prefetch=0,
            grid=(N // B_tile,),
            in_specs=[img_in, img_in, img_in,
                      const(masks.shape),
                      const(w1f.shape), const(w2f.shape)],
            out_specs=[img_out, img_out]),
        compiler_params=pltpu.CompilerParams(**cparams),
    )(x, thr0, thr1, masks, w1f, w2f)

    out = out.reshape(N, C, H, W).astype(out_dtype)
    mid = mid.reshape(N, C, H, W).astype(out_dtype)
    return out, mid


# ---------------- pure-JAX reference (mirrors the PyTorch forward) ----------------
def ref_forward(x, v_init, w1, w2, bn1, bn2):
    def conv(inp, w):
        return jax.lax.conv_general_dilated(
            inp, w, window_strides=(1, 1), padding=((1, 1), (1, 1)),
            dimension_numbers=('NCHW', 'OIHW', 'NCHW'),
            precision=jax.lax.Precision.HIGHEST)

    def bn(inp, p):
        g, b, m, v = p
        return ((inp - m[None, :, None, None])
                / jnp.sqrt(v + BN_EPS)[None, :, None, None]
                * g[None, :, None, None] + b[None, :, None, None])

    def lif(inp, vinit):
        v = vinit + (inp - vinit) / TAU
        return (v >= VTH).astype(jnp.float32)

    out = lif(bn(conv(x, w1), bn1), v_init[0])
    mid = out
    out = bn(conv(out, w2), bn2) + x
    out = lif(out, v_init[1])
    return out, mid


if __name__ == "__main__":
    N, C, H, W = 2, 4, 16, 16   # in_channels == out_channels, stride=1 (required by residual add)
    key = jax.random.PRNGKey(0)
    ks = jax.random.split(key, 12)

    x = jax.random.normal(ks[0], (N, C, H, W), jnp.float32)
    v_init = 0.5 * jax.random.normal(ks[1], (2, N, C, H, W), jnp.float32)
    w1 = 0.3 * jax.random.normal(ks[2], (C, C, 3, 3), jnp.float32)   # OIHW, bias=False
    w2 = 0.3 * jax.random.normal(ks[3], (C, C, 3, 3), jnp.float32)
    bn1 = (1.0 + 0.1 * jax.random.normal(ks[4], (C,), jnp.float32),   # gamma
           0.1 * jax.random.normal(ks[5], (C,), jnp.float32),         # beta
           0.1 * jax.random.normal(ks[6], (C,), jnp.float32),         # running_mean
           1.0 + 0.1 * jnp.abs(jax.random.normal(ks[7], (C,), jnp.float32)))  # running_var
    bn2 = (1.0 + 0.1 * jax.random.normal(ks[8], (C,), jnp.float32),
           0.1 * jax.random.normal(ks[9], (C,), jnp.float32),
           0.1 * jax.random.normal(ks[10], (C,), jnp.float32),
           1.0 + 0.1 * jnp.abs(jax.random.normal(ks[11], (C,), jnp.float32)))

    out_k, mid_k = spiking_residual_block(x, v_init, w1, w2, bn1, bn2)
    jax.block_until_ready((out_k, mid_k))

    out_r, mid_r = ref_forward(x, v_init, w1, w2, bn1, bn2)
    assert out_k.shape == (N, C, H, W) and mid_k.shape == (N, C, H, W)
    # spikes are binary; bf16 MXU operands + the algebraically folded threshold
    # (vs. the f32 Precision.HIGHEST reference) can flip a tiny fraction of
    # borderline spikes -> compare mismatch *rates*.
    mis_mid = float(jnp.mean(jnp.abs(mid_k.astype(jnp.float32) - mid_r)))
    mis_out = float(jnp.mean(jnp.abs(out_k.astype(jnp.float32) - out_r)))
    assert mis_mid < 0.02 and mis_out < 0.02, \
        f"spike mismatch rate too high: mid={mis_mid}, out={mis_out}"

    print("KERNEL_OK")
</pallas_src>

<mosaic_0001>
module attributes {stable_mosaic.version = 11 : i64} {
  func.func @k(%arg0: memref<8x128xf32, #tpu.memory_space<vmem>>, %arg1: memref<8x128xf32, #tpu.memory_space<vmem>>) attributes {dimension_semantics = [], scalar_prefetch = 0 : i64, scratch_operands = 0 : i64, tpu.core_type = #tpu.core_type<tc>} {
    %c0 = arith.constant 0 : index
    %c0_0 = arith.constant 0 : index
    %0 = vector.load %arg0[%c0, %c0_0] : memref<8x128xf32, #tpu.memory_space<vmem>>, vector<8x128xf32>
    %c1_i32 = arith.constant 1 : i32
    %1 = tpu.dynamic_rotate %0 by %c1_i32 dim 1 : vector<8x128xf32>, i32 -> vector<8x128xf32>
    %c0_1 = arith.constant 0 : index
    %c0_2 = arith.constant 0 : index
    %2 = vector.load %arg1[%c0_1, %c0_2] : memref<8x128xf32, #tpu.memory_space<vmem>>, vector<8x128xf32>
    tpu.vector_store %arg1[%c0_1, %c0_2], %1 {strides = array<i32>} : memref<8x128xf32, #tpu.memory_space<vmem>>, vector<8x128xf32>,
    return
  }
}

</mosaic_0001>

<llo_original>
// kernel: tpu_custom_call.1
$region0: #{tpu_custom_call.1}
  #allocation0 [shape = 'u32[]', space=smem, size = 0x4, offset = 0x4, fixed_abs, tag = 'smem constant byte address 0x4 - core index']
  #allocation1 [shape = 'u32[144,128]{1,0:T(1,128)}', space=vmem, size = 0x12000, scoped, tag = 'internal scratch']
  %s0 = inlined_call_operand.hbm [shape: f32[8,128], index: 0, kind: input, shape index: {}]
  %s1 = inlined_call_operand.hbm [shape: f32[8,128], index: 1, kind: output, shape index: {}]
  %s2 = sld [smem:[#allocation0]]
  $region18: #{tpu_custom_call.1} parent=0
    _
  %s4 = ssub.s32 1, %s2
  %s5 = scalar_select 0, %s4, %s2
  $region1: #{tpu_custom_call.1} parent=0
    #allocation2 [shape = 'u8[4096]{0}', space=vmem, size = 0x1000, scoped, tag = 'input window, operand 0, single buffered']
    #allocation3 [shape = 's32[1]{0}', space=sflag, size = 0x4, scoped, tag = 'scoped memory for tpu_custom_call.1']
    #allocation4 [shape = 's32[1]{0}', space=sflag, size = 0x4, scoped, tag = 'scoped memory for tpu_custom_call.1']
    #allocation5 [shape = 'u8[4096]{0}', space=vmem, size = 0x1000, scoped, tag = 'output window, operand 0, single buffered']
    %6 = vsyncpa [#allocation3], 0
    %7 = vsyncpa [#allocation4], 0
    // Predicated region
    $region2: #{tpu_custom_call.1} parent=1 // pred_check
      _
    $region3: #{tpu_custom_call.1} parent=1 // pred_check_branch
      %9 = sbr.rel (0) target = $region5
    $region4: #{tpu_custom_call.1} parent=1 // pred_region
      %s11 = ssub.s32 128, 128
      %12 = vsyncadd [#allocation3], %s11
      %s14 = sshll.u32 [#allocation2], 4
      %s15 = int_to_ptr.vmem [resolvable:$true] %s14
      %17 = dma.hbm_to_vmem [thread:$0]  %s0, 128, %s15, [#allocation3]
    $region5: #{tpu_custom_call.1} parent=1 // pred_fallthru
      _
    // Predicated region
    $region6: #{tpu_custom_call.1} parent=1 // pred_check
      _
    $region7: #{tpu_custom_call.1} parent=1 // pred_check_branch
      %19 = sbr.rel (0) target = $region9
    $region8: #{tpu_custom_call.1} parent=1 // pred_region
      %20 = dma.done [#allocation3], 128
    $region9: #{tpu_custom_call.1} parent=1 // pred_fallthru
      _
    %v21 = vld [vmem:[#allocation2] sm:$0xff]
    %22 = vrot.lane.b32.xlu0 %v21, 1
    %v23 = vpop.permute.xlu0 %22
    %24 = vst [vmem:[#allocation5] sm:$0xff] %v23
    // Predicated region
    $region10: #{tpu_custom_call.1} parent=1 // pred_check
      _
    $region11: #{tpu_custom_call.1} parent=1 // pred_check_branch
      %26 = sbr.rel (0) target = $region13
    $region12: #{tpu_custom_call.1} parent=1 // pred_region
      %s28 = ssub.s32 128, 128
      %29 = vsyncadd [#allocation4], %s28
      %s31 = sshll.u32 [#allocation5], 4
      %s32 = int_to_ptr.vmem [resolvable:$true] %s31
      %34 = dma.vmem_to_hbm [thread:$0]  %s32, 128, %s1, [#allocation4]
    $region13: #{tpu_custom_call.1} parent=1 // pred_fallthru
      _
    // Predicated region
    $region14: #{tpu_custom_call.1} parent=1 // pred_check
      _
    $region15: #{tpu_custom_call.1} parent=1 // pred_check_branch
      %36 = sbr.rel (0) target = $region17
    $region16: #{tpu_custom_call.1} parent=1 // pred_region
      %37 = dma.done [#allocation4], 128
    $region17: #{tpu_custom_call.1} parent=1 // pred_fallthru
      _
    %38 = vsyncpa [#allocation3], 1
    %39 = vsyncpa [#allocation4], 1

</llo_original>
